<compile_context>
chip_gen: v5e
topology: v5e:2x2
jax: 0.10.0
libtpu: 0.0.40
codegen_flags: <defaults>
</compile_context>

<pallas_src>
import functools

import numpy as np

import jax
import jax.numpy as jnp
from jax.experimental import pallas as pl
from jax.experimental.pallas import tpu as pltpu


def _round_up(x, m):
    return ((x + m - 1) // m) * m


# -----------------------------------------------------------------------------
# Pallas kernel: canonical tiled matmul with an f32 VMEM accumulator.
#   out[i, p] = sum_k img[i, k] @ wt[k, p]
# The contraction axis K = input_len * q_pad carries both the bilinear gather
# (q) and the camera-sum (l) of ProjectionConverter._convert.
# -----------------------------------------------------------------------------
def _proj_matmul_kernel(img_ref, wt_ref, o_ref, acc_ref):
    k = pl.program_id(2)

    @pl.when(k == 0)
    def _():
        acc_ref[...] = jnp.zeros_like(acc_ref)

    # bf16 x bf16 -> f32 MXU contraction.
    acc_ref[...] += jnp.dot(img_ref[...], wt_ref[...],
                            preferred_element_type=jnp.float32)

    @pl.when(k == pl.num_programs(2) - 1)
    def _():
        o_ref[...] = acc_ref[...].astype(o_ref.dtype)


# -----------------------------------------------------------------------------
# Weight precompute (plain NumPy, once per (in_h, in_w)): dense bilinear
# sampling matrix for grid_sample(align_corners=True, padding_mode='zeros').
# Returns the flattened [input_len * q_pad, p_pad] bf16 weight slab.
# -----------------------------------------------------------------------------
def build_bilinear_weights(grids, in_h, in_w, q_pad, p_pad, dtype=jnp.bfloat16):
    grids = np.asarray(grids, dtype=np.float32)          # [L, out_h, out_w, 2]
    L, oh, ow, _ = grids.shape
    P = oh * ow
    Q = in_h * in_w

    g = grids.reshape(L, P, 2)
    xf = (g[..., 0] + 1.0) * 0.5 * (in_w - 1)            # align_corners=True
    yf = (g[..., 1] + 1.0) * 0.5 * (in_h - 1)
    x0 = np.floor(xf)
    y0 = np.floor(yf)
    wx1 = xf - x0
    wx0 = 1.0 - wx1
    wy1 = yf - y0
    wy0 = 1.0 - wy1

    wt = np.zeros((L, q_pad, p_pad), np.float32)
    l_idx = np.broadcast_to(np.arange(L)[:, None], (L, P))
    p_idx = np.broadcast_to(np.arange(P)[None, :], (L, P))
    for xc, yc, w in ((x0, y0, wx0 * wy0),
                      (x0 + 1.0, y0, wx1 * wy0),
                      (x0, y0 + 1.0, wx0 * wy1),
                      (x0 + 1.0, y0 + 1.0, wx1 * wy1)):
        valid = (xc >= 0.0) & (xc <= in_w - 1.0) & (yc >= 0.0) & (yc <= in_h - 1.0)
        wm = np.where(valid, w, 0.0).astype(np.float32)        # 'zeros' padding
        qi = np.clip(yc * in_w + xc, 0.0, Q - 1).astype(np.int64)  # OOB taps: weight 0
        np.add.at(wt, (l_idx, qi, p_idx), wm)
    return jnp.asarray(wt.reshape(L * q_pad, p_pad), dtype=dtype)


# -----------------------------------------------------------------------------
# ProjectionConverter.to_converted_tensor / _convert (output_len == 1).
# -----------------------------------------------------------------------------
@functools.partial(
    jax.jit,
    static_argnames=("input_len", "out_h", "out_w", "tile_m", "tile_p", "tile_k"))
def projection_converter_convert(imgs_nchw, wt_flat, *, input_len, out_h, out_w,
                                 tile_m, tile_p, tile_k):
    """imgs_nchw: [B*input_len, C, in_h, in_w] f32
       wt_flat  : [input_len * q_pad, p_pad]   bf16 (precomputed bilinear weights)
       returns  : [B, C, out_h, out_w] f32
    """
    N, C, in_h, in_w = imgs_nchw.shape
    assert N % input_len == 0 and N != 0, f"Batch size should be {input_len}x"
    B = N // input_len
    Q = in_h * in_w
    P = out_h * out_w
    K_pad, P_pad = wt_flat.shape
    q_pad = K_pad // input_len
    assert q_pad >= Q and P_pad >= P
    assert K_pad % tile_k == 0 and P_pad % tile_p == 0

    M = B * C
    M_pad = _round_up(M, tile_m)

    # [B*L, C, H, W] -> [M_pad, L*q_pad]  (all envs' channels in the MXU M dim).
    imgs = imgs_nchw.reshape(B, input_len, C, Q)
    imgs = jnp.transpose(imgs, (0, 2, 1, 3)).reshape(M, input_len, Q)
    imgs = jnp.pad(imgs, ((0, M_pad - M), (0, 0), (0, q_pad - Q)))
    imgs = imgs.reshape(M_pad, K_pad).astype(jnp.bfloat16)

    out = pl.pallas_call(
        _proj_matmul_kernel,
        out_shape=jax.ShapeDtypeStruct((M_pad, P_pad), jnp.float32),
        grid_spec=pltpu.PrefetchScalarGridSpec(
            num_scalar_prefetch=0,
            grid=(M_pad // tile_m, P_pad // tile_p, K_pad // tile_k),
            in_specs=[
                pl.BlockSpec((tile_m, tile_k), lambda i, p, k: (i, k)),
                pl.BlockSpec((tile_k, tile_p), lambda i, p, k: (k, p)),
            ],
            out_specs=pl.BlockSpec((tile_m, tile_p), lambda i, p, k: (i, p)),
            scratch_shapes=[pltpu.VMEM((tile_m, tile_p), jnp.float32)],
        ),
        compiler_params=pltpu.CompilerParams(
            dimension_semantics=("parallel", "parallel", "arbitrary")),
    )(imgs, wt_flat)

    return out[:M, :P].reshape(B, C, out_h, out_w)


# -----------------------------------------------------------------------------
# ProjectionTransformer.forward (channels_last=False path).
# -----------------------------------------------------------------------------
class ProjectionTransformerPallas:
    def __init__(self, grids, sensor_uuids, image_shape, channels_last=False,
                 target_uuids=None, depth_key="depth"):
        self.grids = np.asarray(grids, dtype=np.float32)   # [L, out_h, out_w, 2]
        self.input_len = self.grids.shape[0]
        num_sensors = len(sensor_uuids)
        assert num_sensors % self.input_len == 0 and num_sensors != 0
        assert len(image_shape) == 2
        self.sensor_uuids = sensor_uuids
        self.img_shape = tuple(image_shape)
        self.channels_last = channels_last
        if target_uuids is None:
            target_uuids = self.sensor_uuids[::6]
        self.target_uuids = target_uuids
        self.depth_key = depth_key
        self._weight_cache = {}   # (in_h, in_w) -> (wt_flat, tile_p, tile_k)

    def _get_weights(self, in_h, in_w):
        key = (in_h, in_w)
        if key not in self._weight_cache:
            out_h, out_w = self.img_shape
            P = out_h * out_w
            Q = in_h * in_w
            tile_p = min(512, _round_up(P, 128))      # lane-dense output tiles
            tile_k = min(1024, _round_up(Q, 128))     # bounded VMEM weight tiles
            p_pad = _round_up(P, tile_p)
            q_pad = _round_up(Q, tile_k)
            wt = build_bilinear_weights(self.grids, in_h, in_w, q_pad, p_pad,
                                        dtype=jnp.bfloat16)
            self._weight_cache[key] = (wt, tile_p, tile_k)
        return self._weight_cache[key]

    def __call__(self, observations):
        observations = dict(observations)
        out_h, out_w = self.img_shape
        for i, target_sensor_uuid in enumerate(self.target_uuids):
            in_len = self.input_len
            in_sensor_uuids = self.sensor_uuids[i * in_len:(i + 1) * in_len]
            assert target_sensor_uuid in in_sensor_uuids
            # TODO(synk): depth z-factor rescale (_DepthFrom.Z_VAL cameras) and
            # output_len > 1 are not replicated (default OPTI_CENTER path only).
            sensor_obs = [observations[s] for s in in_sensor_uuids]
            target_obs = observations[target_sensor_uuid]
            sensor_dtype = target_obs.dtype

            imgs = jnp.stack(sensor_obs, axis=1)                 # [B, L, H, W, C]
            imgs = imgs.reshape((-1,) + imgs.shape[2:])          # [B*L, H, W, C]
            if not self.channels_last:
                imgs = jnp.transpose(imgs, (0, 3, 1, 2))         # NCHW
            imgs = imgs.astype(jnp.float32)

            N, C, in_h, in_w = imgs.shape
            assert N % in_len == 0 and N != 0, f"Batch size should be {in_len}x"
            B = N // in_len
            M = B * C
            tile_m = min(256, _round_up(M, 16))
            wt, tile_p, tile_k = self._get_weights(in_h, in_w)
            output = projection_converter_convert(
                imgs, wt, input_len=in_len, out_h=out_h, out_w=out_w,
                tile_m=tile_m, tile_p=tile_p, tile_k=tile_k)
            output = output.astype(sensor_dtype)
            if not self.channels_last:
                output = jnp.transpose(output, (0, 2, 3, 1))     # back to NHWC
            observations[target_sensor_uuid] = output
        return observations


# -----------------------------------------------------------------------------
# Pure-JAX reference: bilinear grid_sample, align_corners=True, zeros padding.
# -----------------------------------------------------------------------------
def _ref_grid_sample_nchw(img, grid):
    C, H, W = img.shape
    gx = (grid[..., 0] + 1.0) * 0.5 * (W - 1)
    gy = (grid[..., 1] + 1.0) * 0.5 * (H - 1)
    x0 = jnp.floor(gx)
    y0 = jnp.floor(gy)
    wx1 = gx - x0
    wx0 = 1.0 - wx1
    wy1 = gy - y0
    wy0 = 1.0 - wy1

    def gather(xc, yc, w):
        valid = (xc >= 0) & (xc <= W - 1) & (yc >= 0) & (yc <= H - 1)
        xi = jnp.clip(xc, 0, W - 1).astype(jnp.int32)
        yi = jnp.clip(yc, 0, H - 1).astype(jnp.int32)
        vals = img[:, yi, xi]                         # [C, out_h, out_w]
        return vals * (w * valid.astype(jnp.float32))[None]

    return (gather(x0, y0, wx0 * wy0) + gather(x0 + 1.0, y0, wx1 * wy0)
            + gather(x0, y0 + 1.0, wx0 * wy1) + gather(x0 + 1.0, y0 + 1.0, wx1 * wy1))


if __name__ == "__main__":
    key = jax.random.PRNGKey(0)
    k_grid, k_mask, k_a, k_b = jax.random.split(key, 4)

    B, L, C = 2, 2, 4          # envs, input cameras per target, channels
    in_h = in_w = 16
    out_h = out_w = 16

    # Deterministic synthetic sampling grids (stand-in for the constant grids
    # produced by CameraProjection.unprojection/projection).
    grids = jax.random.uniform(k_grid, (L, out_h, out_w, 2),
                               minval=-1.0, maxval=1.0, dtype=jnp.float32)
    invalid = jax.random.uniform(k_mask, (L, out_h, out_w, 1)) < 0.1
    grids = jnp.where(invalid, jnp.float32(2.0), grids)   # invalid -> sample zeros

    sensor_uuids = ["rgb_back", "rgb_front"]
    observations = {
        "rgb_back": jax.random.uniform(k_a, (B, in_h, in_w, C), dtype=jnp.float32),
        "rgb_front": jax.random.uniform(k_b, (B, in_h, in_w, C), dtype=jnp.float32),
    }

    transformer = ProjectionTransformerPallas(
        grids, sensor_uuids, image_shape=(out_h, out_w),
        channels_last=False, target_uuids=["rgb_back"])

    out_obs = transformer(observations)
    result = jax.block_until_ready(out_obs["rgb_back"])   # [B, out_h, out_w, C]
    assert result.shape == (B, out_h, out_w, C)

    # Pure-JAX f32 reference of grid_sample + input_len sum for a sanity check.
    imgs_nchw = jnp.transpose(
        jnp.stack([observations["rgb_back"], observations["rgb_front"]], axis=1)
        .reshape(B * L, in_h, in_w, C), (0, 3, 1, 2))
    ref = []
    for b in range(B):
        acc = jnp.zeros((C, out_h, out_w), jnp.float32)
        for l in range(L):
            acc = acc + _ref_grid_sample_nchw(imgs_nchw[b * L + l], grids[l])
        ref.append(jnp.transpose(acc, (1, 2, 0)))
    ref = jnp.stack(ref, axis=0)
    np.testing.assert_allclose(np.asarray(result), np.asarray(ref),
                               rtol=2e-2, atol=2e-2)

    print("KERNEL_OK")
</pallas_src>

<mosaic_0001>
module attributes {stable_mosaic.version = 11 : i64} {
  func.func @_proj_matmul_kernel(%arg0: i32, %arg1: i32, %arg2: i32, %arg3: memref<16x256xbf16, #tpu.memory_space<vmem>>, %arg4: memref<256x256xbf16, #tpu.memory_space<vmem>>, %arg5: memref<16x256xf32, #tpu.memory_space<vmem>>, %arg6: memref<16x256xf32, #tpu.memory_space<vmem>>) attributes {dimension_semantics = [#tpu.dimension_semantics<parallel>, #tpu.dimension_semantics<parallel>, #tpu.dimension_semantics<arbitrary>], iteration_bounds = array<i64: 1, 1, 2>, scalar_prefetch = 0 : i64, scratch_operands = 1 : i64, tpu.core_type = #tpu.core_type<tc>, window_params = [{transform_indices = @transform_0, window_bounds = array<i64: 16, 256>}, {transform_indices = @transform_1, window_bounds = array<i64: 256, 256>}, {transform_indices = @transform_2, window_bounds = array<i64: 16, 256>}]} {
    %c0_i32 = arith.constant 0 : i32
    %0 = arith.cmpi eq, %arg2, %c0_i32 : i32
    %1 = arith.extui %0 : i1 to i32
    %c0_i32_0 = arith.constant 0 : i32
    %2 = arith.cmpi ne, %1, %c0_i32_0 : i32
    scf.if %2 {
      %cst_9 = arith.constant 0.000000e+00 : f32
      %12 = vector.broadcast %cst_9 : f32 to vector<16x256xf32>
      %c0_10 = arith.constant 0 : index
      %c0_11 = arith.constant 0 : index
      %13 = vector.load %arg6[%c0_10, %c0_11] : memref<16x256xf32, #tpu.memory_space<vmem>>, vector<16x256xf32>
      tpu.vector_store %arg6[%c0_10, %c0_11], %12 {strides = array<i32>} : memref<16x256xf32, #tpu.memory_space<vmem>>, vector<16x256xf32>,
    } else {
    }
    %c0 = arith.constant 0 : index
    %c0_1 = arith.constant 0 : index
    %3 = vector.load %arg6[%c0, %c0_1] : memref<16x256xf32, #tpu.memory_space<vmem>>, vector<16x256xf32>
    %c0_2 = arith.constant 0 : index
    %c0_3 = arith.constant 0 : index
    %4 = vector.load %arg3[%c0_2, %c0_3] : memref<16x256xbf16, #tpu.memory_space<vmem>>, vector<16x256xbf16>
    %c0_4 = arith.constant 0 : index
    %c0_5 = arith.constant 0 : index
    %5 = vector.load %arg4[%c0_4, %c0_5] : memref<256x256xbf16, #tpu.memory_space<vmem>>, vector<256x256xbf16>
    %cst = arith.constant dense<0.000000e+00> : vector<16x256xf32>
    %6 = tpu.matmul %4, %5, %cst {dimension_numbers = #tpu.dot_dimension_numbers<[1], [0], [0], [1], [0, 0, 1, 1], [], []>} : vector<16x256xbf16>, vector<256x256xbf16>, vector<16x256xf32> -> vector<16x256xf32>
    %7 = arith.addf %3, %6 : vector<16x256xf32>
    %c0_6 = arith.constant 0 : index
    %c0_7 = arith.constant 0 : index
    %8 = vector.load %arg6[%c0_6, %c0_7] : memref<16x256xf32, #tpu.memory_space<vmem>>, vector<16x256xf32>
    tpu.vector_store %arg6[%c0_6, %c0_7], %7 {strides = array<i32>} : memref<16x256xf32, #tpu.memory_space<vmem>>, vector<16x256xf32>,
    %c1_i32 = arith.constant 1 : i32
    %9 = arith.cmpi eq, %arg2, %c1_i32 : i32
    %10 = arith.extui %9 : i1 to i32
    %c0_i32_8 = arith.constant 0 : i32
    %11 = arith.cmpi ne, %10, %c0_i32_8 : i32
    scf.if %11 {
      %c0_9 = arith.constant 0 : index
      %c0_10 = arith.constant 0 : index
      %12 = vector.load %arg6[%c0_9, %c0_10] : memref<16x256xf32, #tpu.memory_space<vmem>>, vector<16x256xf32>
      %c0_11 = arith.constant 0 : index
      %c0_12 = arith.constant 0 : index
      %13 = vector.load %arg5[%c0_11, %c0_12] : memref<16x256xf32, #tpu.memory_space<vmem>>, vector<16x256xf32>
      tpu.vector_store %arg5[%c0_11, %c0_12], %12 {strides = array<i32>} : memref<16x256xf32, #tpu.memory_space<vmem>>, vector<16x256xf32>,
    } else {
    }
    return
  }
  func.func @transform_0(%arg0: i32, %arg1: i32, %arg2: i32) -> (i32, i32) {
    %c0_i32 = arith.constant 0 : i32
    return %arg0, %arg2 : i32, i32
  }
  func.func @transform_1(%arg0: i32, %arg1: i32, %arg2: i32) -> (i32, i32) {
    %c0_i32 = arith.constant 0 : i32
    return %arg2, %arg1 : i32, i32
  }
  func.func @transform_2(%arg0: i32, %arg1: i32, %arg2: i32) -> (i32, i32) {
    %c0_i32 = arith.constant 0 : i32
    return %arg0, %arg1 : i32, i32
  }
}

</mosaic_0001>

<llo_original>
// kernel: projection_converter_convert.1
$region0: #{projection_converter_convert.1}
  #allocation0 [shape = 'u32[]', space=smem, size = 0x4, offset = 0x4, fixed_abs, tag = 'smem constant byte address 0x4 - core index']
  #allocation1 [shape = 'u32[72,128]{1,0:T(1,128)}', space=vmem, size = 0x9000, scoped, tag = 'internal scratch']
  #allocation2 [shape = 'f32[16,256]{1,0:T(8,128)}', space=vmem, size = 0x4000, scoped, tag = 'scratch operand']
  %s0 = inlined_call_operand.vmem [shape: bf16[16,512], index: 0, kind: input, shape index: {}]
  %s1 = inlined_call_operand.vmem [shape: bf16[512,256], index: 1, kind: input, shape index: {}]
  %s2 = inlined_call_operand.vmem [shape: f32[16,256], index: 2, kind: output, shape index: {}]
  %s3 = sld [smem:[#allocation0]]
  $region87: #{projection_converter_convert.1} parent=0
    _
  %s5 = ssub.s32 1, %s3
  %s6 = scalar_select 0, %s5, %s3
  $region1: #{projection_converter_convert.1} parent=0
    #allocation3 [shape = 'u8[16384]{0}', space=vmem, size = 0x4000, scoped, tag = 'input window, operand 0']
    loop: start=0, step=1, limit=4
    $region2: #{projection_converter_convert.1} parent=1 // loop_pre_header
      _
    $region3: #{projection_converter_convert.1} parent=1 // loop_header
      %s8 = sphi 0, %s12
      %p9 = scmp.ge.s32.totalorder %s8, 4
      %s15 = sphi 0, %s34
      %s16 = sphi 0, %s30
      %s17 = sphi 0, %s26
      %s18 = sphi 0, %s15
      %s19 = sphi 0, %s16
      %s20 = sphi 0, %s17
      %s21 = sphi 0, %s18
      %s22 = sphi 0, %s19
      %s23 = sphi 0, %s20
      %s39 = sphi 0, %s41
      %s42 = sphi 0, %s39
      %s43 = sphi 0, %s42
      %s59 = sphi 0, %s43
      %s67 = sphi 0, %s69
      %s70 = sphi 0, %s67
      %s71 = sphi 0, %s70
      %s87 = sphi 0, %s71
      %s95 = sphi 0, %s97
      %s98 = sphi 0, %s95
      %s99 = sphi 0, %s98
      %s115 = sphi 0, %s99
    $region4: #{projection_converter_convert.1} parent=1 // loop_header_branch
      %11 = sbr.rel (%p9) target = $region8
    $region5: #{projection_converter_convert.1} parent=1 // loop_body
      %s13 = ssub.s32 %s8, 1
      %s14 = ssub.s32 %s8, 2
      %s24 = sadd.s32 1, %s17
      %p25 = scmp.ge.s32.totalorder %s24, 2
      %s26 = scalar_select %p25, 0, %s24
      %s27 = sadd.s32 1, %s16
      %s28 = scalar_select %p25, %s27, %s16
      %p29 = scmp.ge.s32.totalorder %s28, 1
      %s30 = scalar_select %p29, 0, %s28
      %s31 = sadd.s32 1, %s15
      %s32 = scalar_select %p29, %s31, %s15
      %p33 = scmp.ge.s32.totalorder %s32, 1
      %s34 = scalar_select %p33, 0, %s32
      %s35 = ssub.s32 %s15, %s34
      %s36 = ssub.s32 %s17, %s26
      %s37 = sor.u32 %s35, %s36
      %p38 = scmp.eq.s32.totalorder %s37, 0
      %s40 = sadd.s32 %s39, 1
      %s41 = scalar_select %p38, %s39, %s40
      %p44 = pneg %p38
      %p45 = scmp.eq.s32.totalorder %s8, 1
      %p46 = por %p44, %p45
      %p47 = scmp.ne.s32.totalorder %s39, %s42
      %p48 = scmp.eq.s32.totalorder %s8, 0
      %p49 = por %p47, %p48
      %p50 = scmp.ne.s32.totalorder %s39, %s42
      %p51 = scmp.eq.s32.totalorder %s13, 1
      %p52 = por %p50, %p51
      %p53 = scmp.ne.s32.totalorder %s42, %s43
      %p54 = scmp.eq.s32.totalorder %s13, 0
      %p55 = por %p53, %p54
      %p56 = scmp.ne.s32.totalorder %s42, %s43
      %p57 = scmp.eq.s32.totalorder %s14, 1
      %p58 = por %p56, %p57
      %p60 = scmp.ne.s32.totalorder %s43, %s59
      %p61 = scmp.eq.s32.totalorder %s14, 0
      %p62 = por %p60, %p61
      %s63 = ssub.s32 %s17, %s26
      %s64 = ssub.s32 %s16, %s30
      %s65 = sor.u32 %s63, %s64
      %p66 = scmp.eq.s32.totalorder %s65, 0
      %s68 = sadd.s32 %s67, 1
      %s69 = scalar_select %p66, %s67, %s68
      %p72 = pneg %p66
      %p73 = scmp.eq.s32.totalorder %s8, 1
      %p74 = por %p72, %p73
      %p75 = scmp.ne.s32.totalorder %s67, %s70
      %p76 = scmp.eq.s32.totalorder %s8, 0
      %p77 = por %p75, %p76
      %p78 = scmp.ne.s32.totalorder %s67, %s70
      %p79 = scmp.eq.s32.totalorder %s13, 1
      %p80 = por %p78, %p79
      %p81 = scmp.ne.s32.totalorder %s70, %s71
      %p82 = scmp.eq.s32.totalorder %s13, 0
      %p83 = por %p81, %p82
      %p84 = scmp.ne.s32.totalorder %s70, %s71
      %p85 = scmp.eq.s32.totalorder %s14, 1
      %p86 = por %p84, %p85
      %p88 = scmp.ne.s32.totalorder %s71, %s87
      %p89 = scmp.eq.s32.totalorder %s14, 0
      %p90 = por %p88, %p89
      %s91 = ssub.s32 %s15, %s34
      %s92 = ssub.s32 %s16, %s30
      %s93 = sor.u32 %s91, %s92
      %p94 = scmp.eq.s32.totalorder %s93, 0
      %s96 = sadd.s32 %s95, 1
      %s97 = scalar_select %p94, %s95, %s96
      %p100 = pneg %p94
      %p101 = scmp.eq.s32.totalorder %s8, 1
      %p102 = por %p100, %p101
      %p103 = scmp.ne.s32.totalorder %s95, %s98
      %p104 = scmp.eq.s32.totalorder %s8, 0
      %p105 = por %p103, %p104
      %p106 = scmp.ne.s32.totalorder %s95, %s98
      %p107 = scmp.eq.s32.totalorder %s13, 1
      %p108 = por %p106, %p107
      %p109 = scmp.ne.s32.totalorder %s98, %s99
      %p110 = scmp.eq.s32.totalorder %s13, 0
      %p111 = por %p109, %p110
      %p112 = scmp.ne.s32.totalorder %s98, %s99
      %p113 = scmp.eq.s32.totalorder %s14, 1
      %p114 = por %p112, %p113
      %p116 = scmp.ne.s32.totalorder %s99, %s115
      %p117 = scmp.eq.s32.totalorder %s14, 0
      %p118 = por %p116, %p117
      %p119 = scmp.le.s32.totalorder 1, %s8
      %p120 = scmp.lt.s32.totalorder %s8, 3
      %p121 = pnand %p119, %p120
      %p122 = pneg %p121
      // Predicated region
      $region9: #{projection_converter_convert.1} parent=5 // pred_check
        _
      $region10: #{projection_converter_convert.1} parent=5 // pred_check_branch
        %124 = sbr.rel (%p121) target = $region12
      $region11: #{projection_converter_convert.1} parent=5 // pred_region
        %s125 = ssub.s32 %s8, 1
      $region12: #{projection_converter_convert.1} parent=5 // pred_fallthru
        _
      %p126 = scmp.lt.s32.totalorder %s8, 2
      // Predicated region
      $region13: #{projection_converter_convert.1} parent=5 // pred_check
        %p127 = pneg %p126
      $region14: #{projection_converter_convert.1} parent=5 // pred_check_branch
        %129 = sbr.rel (%p127) target = $region16
      $region15: #{projection_converter_convert.1} parent=5 // pred_region
        // Predicated region
        $region17: #{projection_converter_convert.1} parent=15 // pred_check
          %p130 = pneg %p49
        $region18: #{projection_converter_convert.1} parent=15 // pred_check_branch
          %132 = sbr.rel (%p130) target = $region20
        $region19: #{projection_converter_convert.1} parent=15 // pred_region
          %s133 = sand.u32 %s39, 1
          %s134 = sand.u32 %s39, 1
          %s135 = smul.addr %s134, 16
          %s136 = scalar_lea.vmem [#allocation3], %s135
          %s137 = smul.u32 2, %s15
          %s138 = smul.u32 2, %s17
          %s139 = smul.addr %s137, 4
          %s140 = sadd.s32 %s138, %s139
          %s141 = smul.addr %s140, 4
          %s142 = scalar_lea.vmem %s0, %s141
          // Predicated region
          $region21: #{projection_converter_convert.1} parent=19 // pred_check
            _
          $region22: #{projection_converter_convert.1} parent=19 // pred_check_branch
            %144 = sbr.rel (0) target = $region24
          $region23: #{projection_converter_convert.1} parent=19 // pred_region
            // Predicated region
            $region25: #{projection_converter_convert.1} parent=23 // pred_check
              _
            $region26: #{projection_converter_convert.1} parent=23 // pred_check_branch
              %146 = sbr.rel (0) target = $region28
            $region27: #{projection_converter_convert.1} parent=23 // pred_region
              // Predicated region
              $region40: #{projection_converter_convert.1} parent=27 // pred_check
                _
              $region41: #{projection_converter_convert.1} parent=27 // pred_check_branch
                %164 = sbr.rel (0) target = $region43
              $region42: #{projection_converter_convert.1} parent=27 // pred_region
                loop: start=0, step=1, limit=1
                $region44: #{projection_converter_convert.1} parent=42 // loop_pre_header
                  _
                $region45: #{projection_converter_convert.1} parent=42 // loop_header
                  %s166 = sphi 0, %s170
                  %p167 = scmp.ge.s32.totalorder %s166, 1
                  %s171 = sphi %s142, %s142
                  %s172 = sphi %s136, %s136
                $region46: #{projection_converter_convert.1} parent=42 // loop_header_branch
                  %169 = sbr.rel (%p167) target = $region50
                $region47: #{projection_converter_convert.1} parent=42 // loop_body
                  %v173 = vld [vmem:[%s171] sm:$0xff]
                  %174 = vst [vmem:[%s172] sm:$0xff] %v173
                  %v175 = vld [vmem:[%s171 + $0x10] sm:$0xff]
                  %176 = vst [vmem:[%s172 + $0x8] sm:$0xff] %v175
                $region48: #{projection_converter_convert.1} parent=42 // loop_footer
                  %s170 = sadd.s32 1, %s166
                $region49: #{projection_converter_convert.1} parent=42 // loop_footer_branch
                  %165 = sbr.rel target = $region45
                $region50: #{projection_converter_convert.1} parent=42 // loop_exit
                  _
              $region43: #{projection_converter_convert.1} parent=27 // pred_fallthru
                _
              // Predicated region
              $region51: #{projection_converter_convert.1} parent=27 // pred_check
                _
              $region52: #{projection_converter_convert.1} parent=27 // pred_check_branch
                %178 = sbr.rel target = $region54
              $region53: #{projection_converter_convert.1} parent=27 // pred_region
                _
              $region54: #{projection_converter_convert.1} parent=27 // pred_fallthru
                _
            $region28: #{projection_converter_convert.1} parent=23 // pred_fallthru
              _
            // Predicated region
            $region29: #{projection_converter_convert.1} parent=23 // pred_check
              _
            $region30: #{projection_converter_convert.1} parent=23 // pred_check_branch
              %148 = sbr.rel target = $region32
            $region31: #{projection_converter_convert.1} parent=23 // pred_region
              %s150 = ssub.s32 256, 1
              loop: start=0, step=1, limit=1
              $region33: #{projection_converter_convert.1} parent=31 // loop_pre_header
                _
              $region34: #{projection_converter_convert.1} parent=31 // loop_header
                %s152 = sphi 0, %s156
                %p153 = scmp.ge.s32.totalorder %s152, 1
                %s157 = sphi %s142, %s142
                %s158 = sphi %s136, %s136
              $region35: #{projection_converter_convert.1} parent=31 // loop_header_branch
                %155 = sbr.rel (%p153) target = $region39
              $region36: #{projection_converter_convert.1} parent=31 // loop_body
                %v159 = vld [vmem:[%s157] sm:%s150]
                %160 = vst [vmem:[%s158] sm:%s150] %v159
                %v161 = vld [vmem:[%s157 + $0x10] sm:%s150]
                %162 = vst [vmem:[%s158 + $0x8] sm:%s150] %v161
              $region37: #{projection_converter_convert.1} parent=31 // loop_footer
                %s156 = sadd.s32 1, %s152
              $region38: #{projection_converter_convert.1} parent=31 // loop_footer_branch
                %151 = sbr.rel target = $region34
              $region39: #{projection_converter_convert.1} parent=31 // loop_exit
                _
            $region32: #{projection_converter_convert.1} parent=23 // pred_fallthru
              _
          $region24: #{projection_converter_convert.1} parent=19 // pred_fallthru
            _
          %179 = vnop
        $region20: #{projection_converter_convert.1} parent=15 // pred_fallthru
          _
        // Predicated region
        $region55: #{projection_converter_convert.1} parent=15 // pred_check
          %p180 = pneg %p77
        $region56: #{projection_converter_convert.1} parent=15 // pred_check_branch
          %182 = sbr.rel (%p180) target = $region58
        $region57: #{projection_converter_convert.1} parent=15 // pred_region
          %s183 = smul.u32 32, %s17
          %s184 = smul.u32 2, %s16
          %p185 = scmp.lt.s32.totalorder %s183, 63
          %s186 = scalar_select %p185, %s183, 63
          %p187 = scmp.lt.s32.totalorder %s184, 1
          %s188 = scalar_select %p187, %s184, 1
          %s189 = smul.addr %s186, 2
          %s190 = sadd.s32 %s188, %s189
          %s191 = smul.addr %s190, 4
          %s192 = scalar_lea.vmem %s1, %s191
          %s193 = smul.u32 32, %s17
          %s194 = smul.u32 2, %s16
        $region58: #{projection_converter_convert.1} parent=15 // pred_fallthru
          _
      $region16: #{projection_converter_convert.1} parent=5 // pred_fallthru
        _
      %p195 = scmp.le.s32.totalorder 1, %s8
      %p196 = scmp.lt.s32.totalorder %s8, 3
      %p197 = pnand %p195, %p196
      %p198 = pneg %p197
      // Predicated region
      $region59: #{projection_converter_convert.1} parent=5 // pred_check
        _
      $region60: #{projection_converter_convert.1} parent=5 // pred_check_branch
        %200 = sbr.rel (%p197) target = $region62
      $region61: #{projection_converter_convert.1} parent=5 // pred_region
        %s201 = ssub.s32 %s8, 1
        %s202 = sand.u32 %s42, 1
        %s203 = sand.u32 %s42, 1
        %s204 = smul.addr %s203, 16
        %s205 = scalar_lea.vmem [#allocation3], %s204
        // Predicated region
        $region63: #{projection_converter_convert.1} parent=61 // pred_check
          %p206 = pneg %p55
        $region64: #{projection_converter_convert.1} parent=61 // pred_check_branch
          %208 = sbr.rel (%p206) target = $region66
        $region65: #{projection_converter_convert.1} parent=61 // pred_region
          _
        $region66: #{projection_converter_convert.1} parent=61 // pred_fallthru
          _
        %s209 = sand.u32 %s42, 1
        %s210 = sand.u32 %s42, 1
        %s211 = smul.addr %s210, 16
        %s212 = scalar_lea.vmem [#allocation3], %s211
        %p213 = pneg %p55
        %p214 = pneg %p52
        %s215 = smul.u32 32, %s20
        %s216 = smul.u32 2, %s19
        %p217 = scmp.lt.s32.totalorder %s215, 63
        %s218 = scalar_select %p217, %s215, 63
        %p219 = scmp.lt.s32.totalorder %s216, 1
        %s220 = scalar_select %p219, %s216, 1
        %s221 = smul.addr %s218, 2
        %s222 = sadd.s32 %s220, %s221
        %s223 = smul.addr %s222, 4
        %s224 = scalar_lea.vmem %s1, %s223
        %p225 = pneg %p83
        %p226 = pneg %p80
        %p227 = pneg %p111
        %p228 = pneg %p108
        %s229 = smul.u32 2, %s18
        %s230 = smul.u32 2, %s19
        %p231 = scmp.lt.s32.totalorder %s229, 1
        %s232 = scalar_select %p231, %s229, 1
        %p233 = scmp.lt.s32.totalorder %s230, 1
        %s234 = scalar_select %p233, %s230, 1
        %s235 = smul.addr %s232, 2
        %s236 = sadd.s32 %s234, %s235
        %s237 = smul.addr %s236, 8
        %s238 = scalar_lea.vmem %s2, %s237
        %s239 = smul.u32 2, %s18
        %s240 = smul.u32 2, %s20
        %s241 = smul.u32 32, %s20
        %s242 = smul.u32 2, %s19
        %p243 = scmp.lt.s32.totalorder %s241, 63
        %s244 = scalar_select %p243, %s241, 63
        %p245 = scmp.lt.s32.totalorder %s242, 1
        %s246 = scalar_select %p245, %s242, 1
        %s247 = smul.addr %s244, 2
        %s248 = sadd.s32 %s246, %s247
        %s249 = smul.addr %s248, 4
        %s250 = scalar_lea.vmem %s1, %s249
        %s251 = smul.u32 32, %s20
        %s252 = smul.u32 2, %s19
        %s253 = smul.u32 2, %s18
        %s254 = smul.u32 2, %s19
        %p255 = scmp.lt.s32.totalorder %s253, 1
        %s256 = scalar_select %p255, %s253, 1
        %p257 = scmp.lt.s32.totalorder %s254, 1
        %s258 = scalar_select %p257, %s254, 1
        %s259 = smul.addr %s256, 2
        %s260 = sadd.s32 %s258, %s259
        %s261 = smul.addr %s260, 8
        %s262 = scalar_lea.vmem %s2, %s261
        %s263 = smul.u32 2, %s18
        %s264 = smul.u32 2, %s19
        %p265 = scmp.eq.s32.totalorder %s20, 0
        // Predicated region
        $region67: #{projection_converter_convert.1} parent=61 // pred_check
          %p266 = pneg %p265
        $region68: #{projection_converter_convert.1} parent=61 // pred_check_branch
          %268 = sbr.rel (%p266) target = $region70
        $region69: #{projection_converter_convert.1} parent=61 // pred_region
          %269 = vst [vmem:[#allocation2] sm:$0xff] 0.0
          %270 = vst [vmem:[#allocation2 + $0x8] sm:$0xff] 0.0
          %271 = vst [vmem:[#allocation2 + $0x10] sm:$0xff] 0.0
          %272 = vst [vmem:[#allocation2 + $0x18] sm:$0xff] 0.0
        $region70: #{projection_converter_convert.1} parent=61 // pred_fallthru
          _
        %v273 = vld [vmem:[#allocation2] sm:$0xff]
        %v274 = vld [vmem:[#allocation2 + $0x8] sm:$0xff]
        %v275 = vld [vmem:[#allocation2 + $0x10] sm:$0xff]
        %v276 = vld [vmem:[#allocation2 + $0x18] sm:$0xff]
        %v277 = vld [vmem:[%s205] sm:$0xff]
        %v278 = vld [vmem:[%s205 + $0x8] sm:$0xff]
        %v279 = vld [vmem:[%s250] sm:$0xff]
        %v280 = vld [vmem:[%s250 + $0x8] sm:$0xff]
        %v281 = vld [vmem:[%s250 + $0x10] sm:$0xff]
        %v282 = vld [vmem:[%s250 + $0x18] sm:$0xff]
        %v283 = vld [vmem:[%s250 + $0x20] sm:$0xff]
        %v284 = vld [vmem:[%s250 + $0x28] sm:$0xff]
        %v285 = vld [vmem:[%s250 + $0x30] sm:$0xff]
        %v286 = vld [vmem:[%s250 + $0x38] sm:$0xff]
        %v287 = vld [vmem:[%s250 + $0x40] sm:$0xff]
        %v288 = vld [vmem:[%s250 + $0x48] sm:$0xff]
        %v289 = vld [vmem:[%s250 + $0x50] sm:$0xff]
        %v290 = vld [vmem:[%s250 + $0x58] sm:$0xff]
        %v291 = vld [vmem:[%s250 + $0x60] sm:$0xff]
        %v292 = vld [vmem:[%s250 + $0x68] sm:$0xff]
        %v293 = vld [vmem:[%s250 + $0x70] sm:$0xff]
        %v294 = vld [vmem:[%s250 + $0x78] sm:$0xff]
        %v295 = vld [vmem:[%s250 + $0x80] sm:$0xff]
        %v296 = vld [vmem:[%s250 + $0x88] sm:$0xff]
        %v297 = vld [vmem:[%s250 + $0x90] sm:$0xff]
        %v298 = vld [vmem:[%s250 + $0x98] sm:$0xff]
        %v299 = vld [vmem:[%s250 + $0xa0] sm:$0xff]
        %v300 = vld [vmem:[%s250 + $0xa8] sm:$0xff]
        %v301 = vld [vmem:[%s250 + $0xb0] sm:$0xff]
        %v302 = vld [vmem:[%s250 + $0xb8] sm:$0xff]
        %v303 = vld [vmem:[%s250 + $0xc0] sm:$0xff]
        %v304 = vld [vmem:[%s250 + $0xc8] sm:$0xff]
        %v305 = vld [vmem:[%s250 + $0xd0] sm:$0xff]
        %v306 = vld [vmem:[%s250 + $0xd8] sm:$0xff]
        %v307 = vld [vmem:[%s250 + $0xe0] sm:$0xff]
        %v308 = vld [vmem:[%s250 + $0xe8] sm:$0xff]
        %v309 = vld [vmem:[%s250 + $0xf0] sm:$0xff]
        %v310 = vld [vmem:[%s250 + $0xf8] sm:$0xff]
        %v313 = vunpack.c.l.b16 %v277
        %v314 = vunpack.c.h.b16 %v277
        %v315 = vunpack.c.l.b16 %v278
        %v316 = vunpack.c.h.b16 %v278
        %v317 = vpack.c.b16 %v315, %v313
        %v318 = vpack.c.b16 %v316, %v314
        %v353 = vunpack.c.l.b16 %v279
        %v354 = vunpack.c.h.b16 %v279
        %v355 = vunpack.c.l.b16 %v280
        %v356 = vunpack.c.h.b16 %v280
        %v357 = vunpack.c.l.b16 %v281
        %v358 = vunpack.c.h.b16 %v281
        %v359 = vunpack.c.l.b16 %v282
        %v360 = vunpack.c.h.b16 %v282
        %v361 = vunpack.c.l.b16 %v283
        %v362 = vunpack.c.h.b16 %v283
        %v363 = vunpack.c.l.b16 %v284
        %v364 = vunpack.c.h.b16 %v284
        %v365 = vunpack.c.l.b16 %v285
        %v366 = vunpack.c.h.b16 %v285
        %v367 = vunpack.c.l.b16 %v286
        %v368 = vunpack.c.h.b16 %v286
        %v369 = vunpack.c.l.b16 %v287
        %v370 = vunpack.c.h.b16 %v287
        %v371 = vunpack.c.l.b16 %v288
        %v372 = vunpack.c.h.b16 %v288
        %v373 = vunpack.c.l.b16 %v289
        %v374 = vunpack.c.h.b16 %v289
        %v375 = vunpack.c.l.b16 %v290
        %v376 = vunpack.c.h.b16 %v290
        %v377 = vunpack.c.l.b16 %v291
        %v378 = vunpack.c.h.b16 %v291
        %v379 = vunpack.c.l.b16 %v292
        %v380 = vunpack.c.h.b16 %v292
        %v381 = vunpack.c.l.b16 %v293
        %v382 = vunpack.c.h.b16 %v293
        %v383 = vunpack.c.l.b16 %v294
        %v384 = vunpack.c.h.b16 %v294
        %v385 = vunpack.c.l.b16 %v295
        %v386 = vunpack.c.h.b16 %v295
        %v387 = vunpack.c.l.b16 %v296
        %v388 = vunpack.c.h.b16 %v296
        %v389 = vunpack.c.l.b16 %v297
        %v390 = vunpack.c.h.b16 %v297
        %v391 = vunpack.c.l.b16 %v298
        %v392 = vunpack.c.h.b16 %v298
        %v393 = vunpack.c.l.b16 %v299
        %v394 = vunpack.c.h.b16 %v299
        %v395 = vunpack.c.l.b16 %v300
        %v396 = vunpack.c.h.b16 %v300
        %v397 = vunpack.c.l.b16 %v301
        %v398 = vunpack.c.h.b16 %v301
        %v399 = vunpack.c.l.b16 %v302
        %v400 = vunpack.c.h.b16 %v302
        %v401 = vunpack.c.l.b16 %v303
        %v402 = vunpack.c.h.b16 %v303
        %v403 = vunpack.c.l.b16 %v304
        %v404 = vunpack.c.h.b16 %v304
        %v405 = vunpack.c.l.b16 %v305
        %v406 = vunpack.c.h.b16 %v305
        %v407 = vunpack.c.l.b16 %v306
        %v408 = vunpack.c.h.b16 %v306
        %v409 = vunpack.c.l.b16 %v307
        %v410 = vunpack.c.h.b16 %v307
        %v411 = vunpack.c.l.b16 %v308
        %v412 = vunpack.c.h.b16 %v308
        %v413 = vunpack.c.l.b16 %v309
        %v414 = vunpack.c.h.b16 %v309
        %v415 = vunpack.c.l.b16 %v310
        %v416 = vunpack.c.h.b16 %v310
        %v417 = vpack.c.b16 %v355, %v353
        %v418 = vpack.c.b16 %v356, %v354
        %v419 = vpack.c.b16 %v359, %v357
        %v420 = vpack.c.b16 %v360, %v358
        %v421 = vpack.c.b16 %v363, %v361
        %v422 = vpack.c.b16 %v364, %v362
        %v423 = vpack.c.b16 %v367, %v365
        %v424 = vpack.c.b16 %v368, %v366
        %v425 = vpack.c.b16 %v371, %v369
        %v426 = vpack.c.b16 %v372, %v370
        %v427 = vpack.c.b16 %v375, %v373
        %v428 = vpack.c.b16 %v376, %v374
        %v429 = vpack.c.b16 %v379, %v377
        %v430 = vpack.c.b16 %v380, %v378
        %v431 = vpack.c.b16 %v383, %v381
        %v432 = vpack.c.b16 %v384, %v382
        %v433 = vpack.c.b16 %v387, %v385
        %v434 = vpack.c.b16 %v388, %v386
        %v435 = vpack.c.b16 %v391, %v389
        %v436 = vpack.c.b16 %v392, %v390
        %v437 = vpack.c.b16 %v395, %v393
        %v438 = vpack.c.b16 %v396, %v394
        %v439 = vpack.c.b16 %v399, %v397
        %v440 = vpack.c.b16 %v400, %v398
        %v441 = vpack.c.b16 %v403, %v401
        %v442 = vpack.c.b16 %v404, %v402
        %v443 = vpack.c.b16 %v407, %v405
        %v444 = vpack.c.b16 %v408, %v406
        %v445 = vpack.c.b16 %v411, %v409
        %v446 = vpack.c.b16 %v412, %v410
        %v447 = vpack.c.b16 %v415, %v413
        %v448 = vpack.c.b16 %v416, %v414
        %481 = vmatpush.bf16.msra.mxu0 %v431
        %482 = vmatpush.bf16.msra.mxu0 %v429
        %483 = vmatpush.bf16.msra.mxu0 %v427
        %484 = vmatpush.bf16.msra.mxu0 %v425
        %485 = vmatpush.bf16.msra.mxu0 %v423
        %486 = vmatpush.bf16.msra.mxu0 %v421
        %487 = vmatpush.bf16.msra.mxu0 %v419
        %488 = vmatpush.bf16.msra.mxu0 %v417
        %489 = vmatmul.bf16.gmra.mxu0 %v317
        %v490 = vpop.f32.mrf.mxu0
        %v491 = vadd.f32 0.0, %v490
        %v492 = vpop.f32.mrf.mxu0
        %v493 = vadd.f32 0.0, %v492
        %494 = vdwg.mxu0
        %495 = vmatpush.bf16.msra.mxu0 %v447
        %496 = vmatpush.bf16.msra.mxu0 %v445
        %497 = vmatpush.bf16.msra.mxu0 %v443
        %498 = vmatpush.bf16.msra.mxu0 %v441
        %499 = vmatpush.bf16.msra.mxu0 %v439
        %500 = vmatpush.bf16.msra.mxu0 %v437
        %501 = vmatpush.bf16.msra.mxu0 %v435
        %502 = vmatpush.bf16.msra.mxu0 %v433
        %503 = vmatmul.bf16.gmra.mxu0 %v318
        %v504 = vpop.f32.mrf.mxu0
        %v505 = vadd.f32 %v491, %v504
        %v506 = vpop.f32.mrf.mxu0
        %v507 = vadd.f32 %v493, %v506
        %508 = vdwg.mxu0
        %509 = vmatpush.bf16.msra.mxu0 %v432
        %510 = vmatpush.bf16.msra.mxu0 %v430
        %511 = vmatpush.bf16.msra.mxu0 %v428
        %512 = vmatpush.bf16.msra.mxu0 %v426
        %513 = vmatpush.bf16.msra.mxu0 %v424
        %514 = vmatpush.bf16.msra.mxu0 %v422
        %515 = vmatpush.bf16.msra.mxu0 %v420
        %516 = vmatpush.bf16.msra.mxu0 %v418
        %517 = vmatmul.bf16.gmra.mxu0 %v317
        %v518 = vpop.f32.mrf.mxu0
        %v519 = vadd.f32 0.0, %v518
        %v520 = vpop.f32.mrf.mxu0
        %v521 = vadd.f32 0.0, %v520
        %522 = vdwg.mxu0
        %523 = vmatpush.bf16.msra.mxu0 %v448
        %524 = vmatpush.bf16.msra.mxu0 %v446
        %525 = vmatpush.bf16.msra.mxu0 %v444
        %526 = vmatpush.bf16.msra.mxu0 %v442
        %527 = vmatpush.bf16.msra.mxu0 %v440
        %528 = vmatpush.bf16.msra.mxu0 %v438
        %529 = vmatpush.bf16.msra.mxu0 %v436
        %530 = vmatpush.bf16.msra.mxu0 %v434
        %531 = vmatmul.bf16.gmra.mxu0 %v318
        %v532 = vpop.f32.mrf.mxu0
        %v533 = vadd.f32 %v519, %v532
        %v534 = vpop.f32.mrf.mxu0
        %v535 = vadd.f32 %v521, %v534
        %536 = vdwg.mxu0
        %v537 = vadd.f32 %v273, %v505
        %v538 = vadd.f32 %v274, %v533
        %v539 = vadd.f32 %v275, %v507
        %v540 = vadd.f32 %v276, %v535
        %541 = vst [vmem:[#allocation2] sm:$0xff] %v537
        %542 = vst [vmem:[#allocation2 + $0x8] sm:$0xff] %v538
        %543 = vst [vmem:[#allocation2 + $0x10] sm:$0xff] %v539
        %544 = vst [vmem:[#allocation2 + $0x18] sm:$0xff] %v540
        %p545 = scmp.eq.s32.totalorder %s20, 1
        // Predicated region
        $region71: #{projection_converter_convert.1} parent=61 // pred_check
          %p546 = pneg %p545
        $region72: #{projection_converter_convert.1} parent=61 // pred_check_branch
          %548 = sbr.rel (%p546) target = $region74
        $region73: #{projection_converter_convert.1} parent=61 // pred_region
          %v549 = vld [vmem:[#allocation2] sm:$0xff]
          %v550 = vld [vmem:[#allocation2 + $0x8] sm:$0xff]
          %v551 = vld [vmem:[#allocation2 + $0x10] sm:$0xff]
          %v552 = vld [vmem:[#allocation2 + $0x18] sm:$0xff]
          %553 = vst [vmem:[%s262] sm:$0xff] %v549
          %554 = vst [vmem:[%s262 + $0x8] sm:$0xff] %v550
          %555 = vst [vmem:[%s262 + $0x10] sm:$0xff] %v551
          %556 = vst [vmem:[%s262 + $0x18] sm:$0xff] %v552
        $region74: #{projection_converter_convert.1} parent=61 // pred_fallthru
          _
        %s557 = smul.u32 2, %s18
        %s558 = smul.u32 2, %s19
        %p559 = scmp.lt.s32.totalorder %s557, 1
        %s560 = scalar_select %p559, %s557, 1
        %p561 = scmp.lt.s32.totalorder %s558, 1
        %s562 = scalar_select %p561, %s558, 1
        %s563 = smul.addr %s560, 2
        %s564 = sadd.s32 %s562, %s563
        %s565 = smul.addr %s564, 8
        %s566 = scalar_lea.vmem %s2, %s565
        // Predicated region
        $region75: #{projection_converter_convert.1} parent=61 // pred_check
          %p567 = pneg %p108
        $region76: #{projection_converter_convert.1} parent=61 // pred_check_branch
          %569 = sbr.rel (%p567) target = $region78
        $region77: #{projection_converter_convert.1} parent=61 // pred_region
          %s570 = smul.u32 2, %s18
          %s571 = smul.u32 2, %s19
        $region78: #{projection_converter_convert.1} parent=61 // pred_fallthru
          _
        // Predicated region
        $region79: #{projection_converter_convert.1} parent=61 // pred_check
          %p572 = pneg %p108
        $region80: #{projection_converter_convert.1} parent=61 // pred_check_branch
          %574 = sbr.rel (%p572) target = $region82
        $region81: #{projection_converter_convert.1} parent=61 // pred_region
          %s575 = smul.u32 2, %s18
          %s576 = smul.u32 2, %s19
          %p577 = scmp.lt.s32.totalorder %s575, 1
          %s578 = scalar_select %p577, %s575, 1
          %p579 = scmp.lt.s32.totalorder %s576, 1
          %s580 = scalar_select %p579, %s576, 1
          %s581 = smul.addr %s578, 2
          %s582 = sadd.s32 %s580, %s581
          %s583 = smul.addr %s582, 8
          %s584 = scalar_lea.vmem %s2, %s583
        $region82: #{projection_converter_convert.1} parent=61 // pred_fallthru
          _
      $region62: #{projection_converter_convert.1} parent=5 // pred_fallthru
        _
      %p585 = scmp.le.s32.totalorder 2, %s8
      // Predicated region
      $region83: #{projection_converter_convert.1} parent=5 // pred_check
        %p586 = pneg %p585
      $region84: #{projection_converter_convert.1} parent=5 // pred_check_branch
        %588 = sbr.rel (%p586) target = $region86
      $region85: #{projection_converter_convert.1} parent=5 // pred_region
        %s589 = ssub.s32 %s8, 2
      $region86: #{projection_converter_convert.1} parent=5 // pred_fallthru
        _
    $region6: #{projection_converter_convert.1} parent=1 // loop_footer
      %s12 = sadd.s32 1, %s8
    $region7: #{projection_converter_convert.1} parent=1 // loop_footer_branch
      %7 = sbr.rel target = $region3
    $region8: #{projection_converter_convert.1} parent=1 // loop_exit
      _

</llo_original>
